<compile_context>
chip_gen: v7x
topology: tpu7x:2x2x1
jax: 0.10.0
libtpu: 0.0.40
codegen_flags: <defaults>
</compile_context>

<pallas_src>
import jax
import jax.numpy as jnp
from jax import lax
from jax.experimental import pallas as pl
from jax.experimental.pallas import tpu as pltpu


_ROW_GROUP = 8        # output rows per inner step (bounds vreg live ranges)
_MAX_GROUPS = 32      # cap static unroll length for very tall feature maps


def _cpe_kernel(w_ref, b_ref, x_ref, o_ref):
    """Depthwise 3x3 conv + bias with the residual folded into the centre tap.

    w_ref : VMEM (3, 3, LANE)  per-lane tap weights (centre tap already has +1)
    b_ref : VMEM (1, 1, LANE)  per-lane bias
    x_ref : VMEM (H, W, LANE)  input tile   (lane = b*C + c)
    o_ref : VMEM (H, W, LANE)  output tile
    """
    H, W, LANE = o_ref.shape
    cdt = w_ref.dtype
    odt = o_ref.dtype

    # Hoist the 9 per-tap lane vectors and the bias once (each is (1,1,LANE)).
    w00, w01, w02 = w_ref[0:1, 0:1, :], w_ref[0:1, 1:2, :], w_ref[0:1, 2:3, :]
    w10, w11, w12 = w_ref[1:2, 0:1, :], w_ref[1:2, 1:2, :], w_ref[1:2, 2:3, :]
    w20, w21, w22 = w_ref[2:3, 0:1, :], w_ref[2:3, 1:2, :], w_ref[2:3, 2:3, :]
    b = b_ref[...]

    rows = _ROW_GROUP
    if -(-H // rows) > _MAX_GROUPS:
        rows = -(-H // _MAX_GROUPS)
    n_groups = -(-H // rows)

    for g in range(n_groups):                     # static unroll over row groups
        r0 = g * rows
        r1 = min(H, r0 + rows)
        G = r1 - r0                               # output rows in this group
        s0 = r0 - 1 if r0 > 0 else 0              # slab start (1-row top halo)
        s1 = r1 + 1 if r1 < H else H              # slab end   (1-row bottom halo)
        S = s1 - s0
        a0 = r0 - s0                              # slab index of output row r0

        xs = x_ref[s0:s1, :, :].astype(cdt)       # (S, W, LANE) aligned row slab

        # W-direction neighbours: sublane rolls (XLU) + edge-column masks.
        if W > 1:
            col = lax.broadcasted_iota(jnp.int32, (S, W, LANE), 1)
            zero = jnp.zeros((S, W, LANE), cdt)
            x_l = jnp.where(col == 0, zero,
                            pltpu.roll(xs, shift=1, axis=1))        # x[., j-1]
            x_r = jnp.where(col == W - 1, zero,
                            pltpu.roll(xs, shift=W - 1, axis=1))    # x[., j+1]
        else:
            x_l = jnp.zeros((S, W, LANE), cdt)
            x_r = jnp.zeros((S, W, LANE), cdt)

        # Horizontal partial sums for the three kernel rows; bias and the +1
        # residual are folded into the centre-row term.
        r_top = w00 * x_l + w01 * xs + w02 * x_r
        r_mid = (w11 * xs + b) + w10 * x_l + w12 * x_r
        r_bot = w20 * x_l + w21 * xs + w22 * x_r

        # out[r] = r_mid[r] + r_top[r-1] + r_bot[r+1]  (rows outside [0,H) = 0)
        zero_row = jnp.zeros((1, W, LANE), cdt)
        if r0 == 0:
            t_top = zero_row if G == 1 else jnp.concatenate(
                [zero_row, r_top[a0:a0 + G - 1]], axis=0)
        else:
            t_top = r_top[a0 - 1:a0 - 1 + G]
        if r1 == H:
            t_bot = zero_row if G == 1 else jnp.concatenate(
                [r_bot[a0 + 1:a0 + G], zero_row], axis=0)
        else:
            t_bot = r_bot[a0 + 1:a0 + 1 + G]

        # Single lane-dense, leading-dim-aligned store per row group.
        o_ref[r0:r1, :, :] = (r_mid[a0:a0 + G] + t_top + t_bot).astype(odt)


def _vmem_capacity_bytes():
    try:
        info = pltpu.get_tpu_info()
        cap = getattr(info, "vmem_capacity_bytes", None)
        if cap:
            return int(cap)
    except Exception:
        pass
    return 64 * 1024 * 1024          # conservative fallback (v7x per-TC VMEM)


def _pick_lane_chunk(lanes, per_lane_bytes, budget_bytes):
    """Largest multiple-of-128 divisor of `lanes` that (a) keeps one grid step's
    VMEM footprint under budget and (b) leaves >=2 (ideally >=4) grid steps so
    the parallel axis pipelines and shards across v7x's two TensorCores."""
    assert lanes % 128 == 0
    if lanes >= 512:
        cap = lanes // 4
    elif lanes >= 256:
        cap = lanes // 2
    else:
        cap = lanes
    by_budget = max(128, (budget_bytes // max(1, per_lane_bytes)) // 128 * 128)
    cap = min(cap, by_budget)
    best, c = 128, 256
    while c <= cap:
        if lanes % c == 0:
            best = c
        c += 128
    return best


def cpe_forward(x, feat_size, weight, bias):
    """x: (L, B, C); weight: (C, 1, 3, 3); bias: (C,). Returns (L, B, C)."""
    L, B, C = x.shape
    H, W = feat_size
    assert L == H * W
    BC = B * C
    LANES = ((BC + 127) // 128) * 128

    # bf16 inputs compute in bf16 (v6e/v7x bf16 VALU); everything else in f32.
    compute_dtype = jnp.bfloat16 if x.dtype == jnp.bfloat16 else jnp.float32

    # Free, contiguous reshape: (L, B, C) -> (H, W, B*C), lane m = b*C + c.
    x_hwl = x.reshape(H, W, BC)

    # Weights (C,1,3,3) -> (3,3,C); fold the residual (+1) into the centre tap;
    # tile over batch so lane m uses weight[m % C]; same for the bias.
    w33c = jnp.transpose(weight.reshape(C, 3, 3), (1, 2, 0)).astype(jnp.float32)
    w33c = w33c.at[1, 1, :].add(1.0)
    w_full = jnp.tile(w33c, (1, 1, B)).astype(compute_dtype)              # (3,3,BC)
    b_full = jnp.tile(bias.astype(jnp.float32), B).reshape(1, 1, BC).astype(compute_dtype)

    # Lane-dense layout: pad B*C up to a multiple of 128 (zero weights/bias for
    # padded lanes; sliced off below).
    if LANES != BC:
        pad = LANES - BC
        x_hwl = jnp.pad(x_hwl, ((0, 0), (0, 0), (0, pad)))
        w_full = jnp.pad(w_full, ((0, 0), (0, 0), (0, pad)))
        b_full = jnp.pad(b_full, ((0, 0), (0, 0), (0, pad)))

    in_b = jnp.dtype(x.dtype).itemsize
    cdt_b = jnp.dtype(compute_dtype).itemsize

    vmem_cap = _vmem_capacity_bytes()
    vmem_limit = int(min(vmem_cap * 3 // 4, 96 * 1024 * 1024))
    # Per-lane footprint of one grid step: double-buffered in/out tiles plus
    # headroom for live compute values.
    per_lane = H * W * (4 * in_b + 2 * cdt_b)
    lane_chunk = _pick_lane_chunk(LANES, per_lane, vmem_limit // 2)
    n_chunks = LANES // lane_chunk
    # TODO(synk): for very large H*W (where even a 128-lane chunk overflows the
    # budget) add a second grid axis over H with a 1-row halo.

    cost = pl.CostEstimate(
        flops=19 * H * W * LANES,                       # 9 MACs + bias per element
        transcendentals=0,
        bytes_accessed=2 * H * W * LANES * in_b + 10 * LANES * cdt_b,
    )

    out_hwl = pl.pallas_call(
        _cpe_kernel,
        out_shape=jax.ShapeDtypeStruct((H, W, LANES), x.dtype),
        grid_spec=pltpu.PrefetchScalarGridSpec(
            num_scalar_prefetch=0,
            grid=(n_chunks,),
            in_specs=[
                pl.BlockSpec((3, 3, lane_chunk), lambda i: (0, 0, i)),
                pl.BlockSpec((1, 1, lane_chunk), lambda i: (0, 0, i)),
                pl.BlockSpec((H, W, lane_chunk), lambda i: (0, 0, i)),
            ],
            out_specs=pl.BlockSpec((H, W, lane_chunk), lambda i: (0, 0, i)),
        ),
        compiler_params=pltpu.CompilerParams(
            dimension_semantics=("parallel",),
            vmem_limit_bytes=vmem_limit,
        ),
        cost_estimate=cost,
    )(w_full, b_full, x_hwl)

    if LANES != BC:
        out_hwl = out_hwl[:, :, :BC]

    # Dropout(p=0.0) is the identity.  Free reshape back to (L, B, C).
    return out_hwl.reshape(L, B, C)


def cpe_reference(x, feat_size, weight, bias):
    """Pure-JAX reference of the PyTorch forward, for validation."""
    L, B, C = x.shape
    H, W = feat_size
    xn = jnp.transpose(x, (1, 2, 0)).reshape(B, C, H, W).astype(jnp.float32)
    conv = jax.lax.conv_general_dilated(
        xn, weight.astype(jnp.float32),
        window_strides=(1, 1), padding=((1, 1), (1, 1)),
        dimension_numbers=("NCHW", "OIHW", "NCHW"),
        feature_group_count=C,
    ) + bias.astype(jnp.float32)[None, :, None, None]
    y = xn + conv
    return jnp.transpose(y.reshape(B, C, H * W), (2, 0, 1)).astype(x.dtype)


if __name__ == "__main__":
    # Small shapes consistent with the module: dim=C, feat_size=(H, W), L=H*W.
    B, C, H, W = 2, 4, 16, 16
    L = H * W

    key = jax.random.PRNGKey(0)
    kx, kw, kb = jax.random.split(key, 3)

    x = jax.random.normal(kx, (L, B, C), dtype=jnp.float32)
    # nn.Conv2d(C, C, 3, 1, 1, groups=C): depthwise weight (C, 1, 3, 3), bias (C,)
    weight = jax.random.normal(kw, (C, 1, 3, 3), dtype=jnp.float32) * 0.1
    bias = jax.random.normal(kb, (C,), dtype=jnp.float32) * 0.1

    out = cpe_forward(x, (H, W), weight, bias)
    out = jax.block_until_ready(out)

    ref = cpe_reference(x, (H, W), weight, bias)
    assert out.shape == (L, B, C)
    assert jnp.allclose(out, ref, atol=1e-5, rtol=1e-5), "mismatch vs reference"

    print("KERNEL_OK")
</pallas_src>

<mosaic_0001>
module attributes {stable_mosaic.version = 11 : i64} {
  func.func @_cpe_kernel(%arg0: i32, %arg1: memref<3x3x128xf32, #tpu.memory_space<vmem>>, %arg2: memref<1x1x128xf32, #tpu.memory_space<vmem>>, %arg3: memref<16x16x128xf32, #tpu.memory_space<vmem>>, %arg4: memref<16x16x128xf32, #tpu.memory_space<vmem>>) attributes {dimension_semantics = [#tpu.dimension_semantics<parallel>], iteration_bounds = array<i64: 1>, scalar_prefetch = 0 : i64, scratch_operands = 0 : i64, tpu.core_type = #tpu.core_type<tc>, window_params = [{transform_indices = @transform_0, window_bounds = array<i64: 3, 3, 128>}, {transform_indices = @transform_1, window_bounds = array<i64: 1, 1, 128>}, {transform_indices = @transform_2, window_bounds = array<i64: 16, 16, 128>}, {transform_indices = @transform_3, window_bounds = array<i64: 16, 16, 128>}]} {
    %c0 = arith.constant 0 : index
    %c0_0 = arith.constant 0 : index
    %c0_1 = arith.constant 0 : index
    %0 = vector.load %arg1[%c0, %c0_0, %c0_1] : memref<3x3x128xf32, #tpu.memory_space<vmem>>, vector<1x1x128xf32>
    %c0_2 = arith.constant 0 : index
    %c1 = arith.constant 1 : index
    %c0_3 = arith.constant 0 : index
    %1 = vector.load %arg1[%c0_2, %c1, %c0_3] : memref<3x3x128xf32, #tpu.memory_space<vmem>>, vector<1x1x128xf32>
    %c0_4 = arith.constant 0 : index
    %c2 = arith.constant 2 : index
    %c0_5 = arith.constant 0 : index
    %2 = vector.load %arg1[%c0_4, %c2, %c0_5] : memref<3x3x128xf32, #tpu.memory_space<vmem>>, vector<1x1x128xf32>
    %c1_6 = arith.constant 1 : index
    %c0_7 = arith.constant 0 : index
    %c0_8 = arith.constant 0 : index
    %3 = vector.load %arg1[%c1_6, %c0_7, %c0_8] : memref<3x3x128xf32, #tpu.memory_space<vmem>>, vector<1x1x128xf32>
    %c1_9 = arith.constant 1 : index
    %c1_10 = arith.constant 1 : index
    %c0_11 = arith.constant 0 : index
    %4 = vector.load %arg1[%c1_9, %c1_10, %c0_11] : memref<3x3x128xf32, #tpu.memory_space<vmem>>, vector<1x1x128xf32>
    %c1_12 = arith.constant 1 : index
    %c2_13 = arith.constant 2 : index
    %c0_14 = arith.constant 0 : index
    %5 = vector.load %arg1[%c1_12, %c2_13, %c0_14] : memref<3x3x128xf32, #tpu.memory_space<vmem>>, vector<1x1x128xf32>
    %c2_15 = arith.constant 2 : index
    %c0_16 = arith.constant 0 : index
    %c0_17 = arith.constant 0 : index
    %6 = vector.load %arg1[%c2_15, %c0_16, %c0_17] : memref<3x3x128xf32, #tpu.memory_space<vmem>>, vector<1x1x128xf32>
    %c2_18 = arith.constant 2 : index
    %c1_19 = arith.constant 1 : index
    %c0_20 = arith.constant 0 : index
    %7 = vector.load %arg1[%c2_18, %c1_19, %c0_20] : memref<3x3x128xf32, #tpu.memory_space<vmem>>, vector<1x1x128xf32>
    %c2_21 = arith.constant 2 : index
    %c2_22 = arith.constant 2 : index
    %c0_23 = arith.constant 0 : index
    %8 = vector.load %arg1[%c2_21, %c2_22, %c0_23] : memref<3x3x128xf32, #tpu.memory_space<vmem>>, vector<1x1x128xf32>
    %c0_24 = arith.constant 0 : index
    %c0_25 = arith.constant 0 : index
    %c0_26 = arith.constant 0 : index
    %9 = vector.load %arg2[%c0_24, %c0_25, %c0_26] : memref<1x1x128xf32, #tpu.memory_space<vmem>>, vector<1x1x128xf32>
    %c0_27 = arith.constant 0 : index
    %c0_28 = arith.constant 0 : index
    %c0_29 = arith.constant 0 : index
    %10 = vector.load %arg3[%c0_27, %c0_28, %c0_29] : memref<16x16x128xf32, #tpu.memory_space<vmem>>, vector<9x16x128xf32>
    %11 = tpu.iota {dimensions = array<i32: 1>} : vector<9x16x128xi32>
    %cst = arith.constant 0.000000e+00 : f32
    %12 = vector.broadcast %cst : f32 to vector<9x16x128xf32>
    %c0_i32 = arith.constant 0 : i32
    %13 = vector.broadcast %c0_i32 : i32 to vector<9x16x128xi32>
    %14 = arith.cmpi eq, %11, %13 : vector<9x16x128xi32>
    %c1_i32 = arith.constant 1 : i32
    %15 = tpu.dynamic_rotate %10 by %c1_i32 dim 1 : vector<9x16x128xf32>, i32 -> vector<9x16x128xf32>
    %16 = arith.select %14, %12, %15 : vector<9x16x128xi1>, vector<9x16x128xf32>
    %c15_i32 = arith.constant 15 : i32
    %17 = vector.broadcast %c15_i32 : i32 to vector<9x16x128xi32>
    %18 = arith.cmpi eq, %11, %17 : vector<9x16x128xi32>
    %c15_i32_30 = arith.constant 15 : i32
    %19 = tpu.dynamic_rotate %10 by %c15_i32_30 dim 1 : vector<9x16x128xf32>, i32 -> vector<9x16x128xf32>
    %20 = arith.select %18, %12, %19 : vector<9x16x128xi1>, vector<9x16x128xf32>
    %21 = vector.broadcast %0 : vector<1x1x128xf32> to vector<9x16x128xf32>
    %22 = arith.mulf %21, %16 : vector<9x16x128xf32>
    %23 = vector.broadcast %1 : vector<1x1x128xf32> to vector<9x16x128xf32>
    %24 = arith.mulf %23, %10 : vector<9x16x128xf32>
    %25 = arith.addf %22, %24 : vector<9x16x128xf32>
    %26 = vector.broadcast %2 : vector<1x1x128xf32> to vector<9x16x128xf32>
    %27 = arith.mulf %26, %20 : vector<9x16x128xf32>
    %28 = arith.addf %25, %27 : vector<9x16x128xf32>
    %29 = vector.broadcast %4 : vector<1x1x128xf32> to vector<9x16x128xf32>
    %30 = arith.mulf %29, %10 : vector<9x16x128xf32>
    %31 = vector.broadcast %9 : vector<1x1x128xf32> to vector<9x16x128xf32>
    %32 = arith.addf %30, %31 : vector<9x16x128xf32>
    %33 = vector.broadcast %3 : vector<1x1x128xf32> to vector<9x16x128xf32>
    %34 = arith.mulf %33, %16 : vector<9x16x128xf32>
    %35 = arith.addf %32, %34 : vector<9x16x128xf32>
    %36 = vector.broadcast %5 : vector<1x1x128xf32> to vector<9x16x128xf32>
    %37 = arith.mulf %36, %20 : vector<9x16x128xf32>
    %38 = arith.addf %35, %37 : vector<9x16x128xf32>
    %39 = vector.broadcast %6 : vector<1x1x128xf32> to vector<9x16x128xf32>
    %40 = arith.mulf %39, %16 : vector<9x16x128xf32>
    %41 = vector.broadcast %7 : vector<1x1x128xf32> to vector<9x16x128xf32>
    %42 = arith.mulf %41, %10 : vector<9x16x128xf32>
    %43 = arith.addf %40, %42 : vector<9x16x128xf32>
    %44 = vector.broadcast %8 : vector<1x1x128xf32> to vector<9x16x128xf32>
    %45 = arith.mulf %44, %20 : vector<9x16x128xf32>
    %46 = arith.addf %43, %45 : vector<9x16x128xf32>
    %cst_31 = arith.constant 0.000000e+00 : f32
    %47 = vector.broadcast %cst_31 : f32 to vector<1x16x128xf32>
    %48 = vector.extract_strided_slice %28 {offsets = [0, 0, 0], sizes = [7, 16, 128], strides = [1, 1, 1]} : vector<9x16x128xf32> to vector<7x16x128xf32>
    %49 = tpu.concatenate %47, %48 in 0 : vector<1x16x128xf32>, vector<7x16x128xf32> -> vector<8x16x128xf32>
    %50 = vector.extract_strided_slice %46 {offsets = [1, 0, 0], sizes = [8, 16, 128], strides = [1, 1, 1]} : vector<9x16x128xf32> to vector<8x16x128xf32>
    %51 = vector.extract_strided_slice %38 {offsets = [0, 0, 0], sizes = [8, 16, 128], strides = [1, 1, 1]} : vector<9x16x128xf32> to vector<8x16x128xf32>
    %52 = arith.addf %51, %49 : vector<8x16x128xf32>
    %53 = arith.addf %52, %50 : vector<8x16x128xf32>
    %c0_32 = arith.constant 0 : index
    %c0_33 = arith.constant 0 : index
    %c0_34 = arith.constant 0 : index
    %54 = vector.load %arg4[%c0_32, %c0_33, %c0_34] : memref<16x16x128xf32, #tpu.memory_space<vmem>>, vector<8x16x128xf32>
    tpu.vector_store %arg4[%c0_32, %c0_33, %c0_34], %53 {strides = array<i32>} : memref<16x16x128xf32, #tpu.memory_space<vmem>>, vector<8x16x128xf32>,
    %c7 = arith.constant 7 : index
    %c0_35 = arith.constant 0 : index
    %c0_36 = arith.constant 0 : index
    %55 = vector.load %arg3[%c7, %c0_35, %c0_36] : memref<16x16x128xf32, #tpu.memory_space<vmem>>, vector<9x16x128xf32>
    %56 = tpu.iota {dimensions = array<i32: 1>} : vector<9x16x128xi32>
    %cst_37 = arith.constant 0.000000e+00 : f32
    %57 = vector.broadcast %cst_37 : f32 to vector<9x16x128xf32>
    %c0_i32_38 = arith.constant 0 : i32
    %58 = vector.broadcast %c0_i32_38 : i32 to vector<9x16x128xi32>
    %59 = arith.cmpi eq, %56, %58 : vector<9x16x128xi32>
    %c1_i32_39 = arith.constant 1 : i32
    %60 = tpu.dynamic_rotate %55 by %c1_i32_39 dim 1 : vector<9x16x128xf32>, i32 -> vector<9x16x128xf32>
    %61 = arith.select %59, %57, %60 : vector<9x16x128xi1>, vector<9x16x128xf32>
    %c15_i32_40 = arith.constant 15 : i32
    %62 = vector.broadcast %c15_i32_40 : i32 to vector<9x16x128xi32>
    %63 = arith.cmpi eq, %56, %62 : vector<9x16x128xi32>
    %c15_i32_41 = arith.constant 15 : i32
    %64 = tpu.dynamic_rotate %55 by %c15_i32_41 dim 1 : vector<9x16x128xf32>, i32 -> vector<9x16x128xf32>
    %65 = arith.select %63, %57, %64 : vector<9x16x128xi1>, vector<9x16x128xf32>
    %66 = vector.broadcast %0 : vector<1x1x128xf32> to vector<9x16x128xf32>
    %67 = arith.mulf %66, %61 : vector<9x16x128xf32>
    %68 = vector.broadcast %1 : vector<1x1x128xf32> to vector<9x16x128xf32>
    %69 = arith.mulf %68, %55 : vector<9x16x128xf32>
    %70 = arith.addf %67, %69 : vector<9x16x128xf32>
    %71 = vector.broadcast %2 : vector<1x1x128xf32> to vector<9x16x128xf32>
    %72 = arith.mulf %71, %65 : vector<9x16x128xf32>
    %73 = arith.addf %70, %72 : vector<9x16x128xf32>
    %74 = vector.broadcast %4 : vector<1x1x128xf32> to vector<9x16x128xf32>
    %75 = arith.mulf %74, %55 : vector<9x16x128xf32>
    %76 = vector.broadcast %9 : vector<1x1x128xf32> to vector<9x16x128xf32>
    %77 = arith.addf %75, %76 : vector<9x16x128xf32>
    %78 = vector.broadcast %3 : vector<1x1x128xf32> to vector<9x16x128xf32>
    %79 = arith.mulf %78, %61 : vector<9x16x128xf32>
    %80 = arith.addf %77, %79 : vector<9x16x128xf32>
    %81 = vector.broadcast %5 : vector<1x1x128xf32> to vector<9x16x128xf32>
    %82 = arith.mulf %81, %65 : vector<9x16x128xf32>
    %83 = arith.addf %80, %82 : vector<9x16x128xf32>
    %84 = vector.broadcast %6 : vector<1x1x128xf32> to vector<9x16x128xf32>
    %85 = arith.mulf %84, %61 : vector<9x16x128xf32>
    %86 = vector.broadcast %7 : vector<1x1x128xf32> to vector<9x16x128xf32>
    %87 = arith.mulf %86, %55 : vector<9x16x128xf32>
    %88 = arith.addf %85, %87 : vector<9x16x128xf32>
    %89 = vector.broadcast %8 : vector<1x1x128xf32> to vector<9x16x128xf32>
    %90 = arith.mulf %89, %65 : vector<9x16x128xf32>
    %91 = arith.addf %88, %90 : vector<9x16x128xf32>
    %cst_42 = arith.constant 0.000000e+00 : f32
    %92 = vector.broadcast %cst_42 : f32 to vector<1x16x128xf32>
    %93 = vector.extract_strided_slice %73 {offsets = [0, 0, 0], sizes = [8, 16, 128], strides = [1, 1, 1]} : vector<9x16x128xf32> to vector<8x16x128xf32>
    %94 = vector.extract_strided_slice %91 {offsets = [2, 0, 0], sizes = [7, 16, 128], strides = [1, 1, 1]} : vector<9x16x128xf32> to vector<7x16x128xf32>
    %95 = tpu.concatenate %94, %92 in 0 : vector<7x16x128xf32>, vector<1x16x128xf32> -> vector<8x16x128xf32>
    %96 = vector.extract_strided_slice %83 {offsets = [1, 0, 0], sizes = [8, 16, 128], strides = [1, 1, 1]} : vector<9x16x128xf32> to vector<8x16x128xf32>
    %97 = arith.addf %96, %93 : vector<8x16x128xf32>
    %98 = arith.addf %97, %95 : vector<8x16x128xf32>
    %c8 = arith.constant 8 : index
    %c0_43 = arith.constant 0 : index
    %c0_44 = arith.constant 0 : index
    %99 = vector.load %arg4[%c8, %c0_43, %c0_44] : memref<16x16x128xf32, #tpu.memory_space<vmem>>, vector<8x16x128xf32>
    tpu.vector_store %arg4[%c8, %c0_43, %c0_44], %98 {strides = array<i32>} : memref<16x16x128xf32, #tpu.memory_space<vmem>>, vector<8x16x128xf32>,
    return
  }
  func.func @transform_0(%arg0: i32) -> (i32, i32, i32) {
    %c0_i32 = arith.constant 0 : i32
    %c0_i32_0 = arith.constant 0 : i32
    %c0_i32_1 = arith.constant 0 : i32
    return %c0_i32, %c0_i32_0, %arg0 : i32, i32, i32
  }
  func.func @transform_1(%arg0: i32) -> (i32, i32, i32) {
    %c0_i32 = arith.constant 0 : i32
    %c0_i32_0 = arith.constant 0 : i32
    %c0_i32_1 = arith.constant 0 : i32
    return %c0_i32, %c0_i32_0, %arg0 : i32, i32, i32
  }
  func.func @transform_2(%arg0: i32) -> (i32, i32, i32) {
    %c0_i32 = arith.constant 0 : i32
    %c0_i32_0 = arith.constant 0 : i32
    %c0_i32_1 = arith.constant 0 : i32
    return %c0_i32, %c0_i32_0, %arg0 : i32, i32, i32
  }
  func.func @transform_3(%arg0: i32) -> (i32, i32, i32) {
    %c0_i32 = arith.constant 0 : i32
    %c0_i32_0 = arith.constant 0 : i32
    %c0_i32_1 = arith.constant 0 : i32
    return %c0_i32, %c0_i32_0, %arg0 : i32, i32, i32
  }
}

</mosaic_0001>

<llo_original>
// kernel: tpu_custom_call.1
$region0: #{tpu_custom_call.1}
  #allocation0 [shape = 'u32[]', space=smem, size = 0x4, offset = 0x4, fixed_abs, tag = 'smem constant byte address 0x4 - core index']
  #allocation1 [shape = 'u32[144,128]{1,0:T(1,128)}', space=vmem, size = 0x12000, scoped, tag = 'internal scratch']
  %s0 = inlined_call_operand.hbm [shape: f32[3,3,128], index: 0, kind: input, shape index: {}]
  %s1 = inlined_call_operand.vmem [shape: f32[1,1,128], index: 1, kind: input, shape index: {}]
  %s2 = inlined_call_operand.hbm [shape: f32[16,16,128], index: 2, kind: input, shape index: {}]
  %s3 = inlined_call_operand.hbm [shape: f32[16,16,128], index: 3, kind: output, shape index: {}]
  %s4 = sld [smem:[#allocation0]]
  $region30: #{tpu_custom_call.1} parent=0
    _
  %s6 = ssub.s32 1, %s4
  %s7 = scalar_select 0, %s6, %s4
  $region1: #{tpu_custom_call.1} parent=0
    #allocation2 [shape = 'u8[6144]{0}', space=vmem, size = 0x1800, scoped, tag = 'input window, operand 0, single buffered']
    #allocation3 [shape = 's32[1]{0}', space=sflag, size = 0x4, scoped, tag = 'scoped memory for tpu_custom_call.1']
    #allocation4 [shape = 's32[1]{0}', space=sflag, size = 0x4, scoped, tag = 'scoped memory for tpu_custom_call.1']
    #allocation5 [shape = 'u8[131072]{0}', space=vmem, size = 0x20000, scoped, tag = 'input window, operand 2, single buffered']
    #allocation6 [shape = 's32[1]{0}', space=sflag, size = 0x4, scoped, tag = 'scoped memory for tpu_custom_call.1']
    #allocation7 [shape = 'u8[131072]{0}', space=vmem, size = 0x20000, scoped, tag = 'output window, operand 0, single buffered']
    %8 = vsyncpa [#allocation3], 0
    %9 = vsyncpa [#allocation6], 0
    %10 = vsyncpa [#allocation4], 0
    // Predicated region
    $region2: #{tpu_custom_call.1} parent=1 // pred_check
      _
    $region3: #{tpu_custom_call.1} parent=1 // pred_check_branch
      %12 = sbr.rel (0) target = $region5
    $region4: #{tpu_custom_call.1} parent=1 // pred_region
      %s14 = ssub.s32 192, 192
      %15 = vsyncadd [#allocation3], %s14
      %s16 = sshll.u32 [#allocation2], 4
      %s17 = int_to_ptr.vmem [resolvable:$true] %s16
      %22 = dma.hbm_to_vmem [thread:$0]  %s0, 192, %s17, [#allocation3], 64, 64, 4
    $region5: #{tpu_custom_call.1} parent=1 // pred_fallthru
      _
    // Predicated region
    $region6: #{tpu_custom_call.1} parent=1 // pred_check
      _
    $region7: #{tpu_custom_call.1} parent=1 // pred_check_branch
      %24 = sbr.rel (0) target = $region9
    $region8: #{tpu_custom_call.1} parent=1 // pred_region
      _
    $region9: #{tpu_custom_call.1} parent=1 // pred_fallthru
      _
    // Predicated region
    $region10: #{tpu_custom_call.1} parent=1 // pred_check
      _
    $region11: #{tpu_custom_call.1} parent=1 // pred_check_branch
      %26 = sbr.rel (0) target = $region13
    $region12: #{tpu_custom_call.1} parent=1 // pred_region
      %s28 = ssub.s32 4096, 4096
      %29 = vsyncadd [#allocation6], %s28
      %s30 = sshll.u32 [#allocation5], 4
      %s31 = int_to_ptr.vmem [resolvable:$true] %s30
      %36 = dma.hbm_to_vmem [thread:$0]  %s2, 4096, %s31, [#allocation6], 128, 128, 8
    $region13: #{tpu_custom_call.1} parent=1 // pred_fallthru
      _
    // Predicated region
    $region14: #{tpu_custom_call.1} parent=1 // pred_check
      _
    $region15: #{tpu_custom_call.1} parent=1 // pred_check_branch
      %38 = sbr.rel (0) target = $region17
    $region16: #{tpu_custom_call.1} parent=1 // pred_region
      %39 = dma.done [#allocation3], 192
    $region17: #{tpu_custom_call.1} parent=1 // pred_fallthru
      _
    // Predicated region
    $region18: #{tpu_custom_call.1} parent=1 // pred_check
      _
    $region19: #{tpu_custom_call.1} parent=1 // pred_check_branch
      %41 = sbr.rel (0) target = $region21
    $region20: #{tpu_custom_call.1} parent=1 // pred_region
      %42 = dma.done [#allocation6], 4096
    $region21: #{tpu_custom_call.1} parent=1 // pred_fallthru
      _
    %v43 = vld [vmem:[#allocation2] sm:$0x1]
    %v44 = vld [vmem:[#allocation2 + $0x1] sm:$0x1]
    %v45 = vld [vmem:[#allocation2 + $0x2] sm:$0x1]
    %s46 = scalar_lea.vmem [#allocation2], 4
    %v47 = vld [vmem:[%s46] sm:$0x1]
    %v48 = vld [vmem:[%s46 + $0x1] sm:$0x1]
    %v49 = vld [vmem:[%s46 + $0x2] sm:$0x1]
    %s50 = scalar_lea.vmem [#allocation2], 8
    %v51 = vld [vmem:[%s50] sm:$0x1]
    %v52 = vld [vmem:[%s50 + $0x1] sm:$0x1]
    %v53 = vld [vmem:[%s50 + $0x2] sm:$0x1]
    %v54 = vld [vmem:[%s1] sm:$0x1]
    %v55 = vld [vmem:[#allocation5] sm:$0xff]
    %v56 = vld [vmem:[#allocation5 + $0x8] sm:$0xff]
    %v57 = vld [vmem:[#allocation5 + $0x10] sm:$0xff]
    %v58 = vld [vmem:[#allocation5 + $0x18] sm:$0xff]
    %v59 = vld [vmem:[#allocation5 + $0x20] sm:$0xff]
    %v60 = vld [vmem:[#allocation5 + $0x28] sm:$0xff]
    %v61 = vld [vmem:[#allocation5 + $0x30] sm:$0xff]
    %v62 = vld [vmem:[#allocation5 + $0x38] sm:$0xff]
    %v63 = vld [vmem:[#allocation5 + $0x40] sm:$0xff]
    %v64 = vld [vmem:[#allocation5 + $0x48] sm:$0xff]
    %v65 = vld [vmem:[#allocation5 + $0x50] sm:$0xff]
    %v66 = vld [vmem:[#allocation5 + $0x58] sm:$0xff]
    %v67 = vld [vmem:[#allocation5 + $0x60] sm:$0xff]
    %v68 = vld [vmem:[#allocation5 + $0x68] sm:$0xff]
    %v69 = vld [vmem:[#allocation5 + $0x70] sm:$0xff]
    %v70 = vld [vmem:[#allocation5 + $0x78] sm:$0xff]
    %v71 = vld [vmem:[#allocation5 + $0x80] sm:$0xff]
    %v72 = vld [vmem:[#allocation5 + $0x88] sm:$0xff]
    %v73 = vlaneseq
    %v74 = vshrl.u32 %v73, 7
    %v75 = vadd.s32 %v74, 8
    %vm76 = vcmp.eq.s32.totalorder %v74, 0
    %vm77 = vcmp.eq.s32.totalorder %v75, 0
    %v78 = vrot.slane %v55, 7
    %v79 = vrot.slane %v57, 7
    %v80 = vrot.slane %v59, 7
    %v81 = vrot.slane %v61, 7
    %v82 = vrot.slane %v63, 7
    %v83 = vrot.slane %v65, 7
    %v84 = vrot.slane %v67, 7
    %v85 = vrot.slane %v69, 7
    %v86 = vrot.slane %v71, 7
    %v87 = vrot.slane %v56, 7
    %v88 = vrot.slane %v58, 7
    %v89 = vrot.slane %v60, 7
    %v90 = vrot.slane %v62, 7
    %v91 = vrot.slane %v64, 7
    %v92 = vrot.slane %v66, 7
    %v93 = vrot.slane %v68, 7
    %v94 = vrot.slane %v70, 7
    %v95 = vrot.slane %v72, 7
    %vm96 = vcmp.lt.s32.totalorder %v74, 1
    %v97 = vsel %vm96, %v78, %v87
    %v98 = vsel %vm96, %v79, %v88
    %v99 = vsel %vm96, %v80, %v89
    %v100 = vsel %vm96, %v81, %v90
    %v101 = vsel %vm96, %v82, %v91
    %v102 = vsel %vm96, %v83, %v92
    %v103 = vsel %vm96, %v84, %v93
    %v104 = vsel %vm96, %v85, %v94
    %v105 = vsel %vm96, %v86, %v95
    %v106 = vsel %vm96, %v87, %v78
    %v107 = vsel %vm96, %v88, %v79
    %v108 = vsel %vm96, %v89, %v80
    %v109 = vsel %vm96, %v90, %v81
    %v110 = vsel %vm96, %v91, %v82
    %v111 = vsel %vm96, %v92, %v83
    %v112 = vsel %vm96, %v93, %v84
    %v113 = vsel %vm96, %v94, %v85
    %v114 = vsel %vm96, %v95, %v86
    %v115 = vsel %vm76, 0.0, %v106
    %v116 = vsel %vm77, 0.0, %v97
    %v117 = vsel %vm76, 0.0, %v107
    %v118 = vsel %vm77, 0.0, %v98
    %v119 = vsel %vm76, 0.0, %v108
    %v120 = vsel %vm77, 0.0, %v99
    %v121 = vsel %vm76, 0.0, %v109
    %v122 = vsel %vm77, 0.0, %v100
    %v123 = vsel %vm76, 0.0, %v110
    %v124 = vsel %vm77, 0.0, %v101
    %v125 = vsel %vm76, 0.0, %v111
    %v126 = vsel %vm77, 0.0, %v102
    %v127 = vsel %vm76, 0.0, %v112
    %v128 = vsel %vm77, 0.0, %v103
    %v129 = vsel %vm76, 0.0, %v113
    %v130 = vsel %vm77, 0.0, %v104
    %v131 = vsel %vm76, 0.0, %v114
    %v132 = vsel %vm77, 0.0, %v105
    %vm133 = vcmp.eq.s32.totalorder %v74, 15
    %vm134 = vcmp.eq.s32.totalorder %v75, 15
    %v135 = vrot.slane %v55, 1
    %v136 = vrot.slane %v57, 1
    %v137 = vrot.slane %v59, 1
    %v138 = vrot.slane %v61, 1
    %v139 = vrot.slane %v63, 1
    %v140 = vrot.slane %v65, 1
    %v141 = vrot.slane %v67, 1
    %v142 = vrot.slane %v69, 1
    %v143 = vrot.slane %v71, 1
    %v144 = vrot.slane %v56, 1
    %v145 = vrot.slane %v58, 1
    %v146 = vrot.slane %v60, 1
    %v147 = vrot.slane %v62, 1
    %v148 = vrot.slane %v64, 1
    %v149 = vrot.slane %v66, 1
    %v150 = vrot.slane %v68, 1
    %v151 = vrot.slane %v70, 1
    %v152 = vrot.slane %v72, 1
    %vm153 = vcmp.lt.s32.totalorder %v74, 7
    %v154 = vsel %vm153, %v135, %v144
    %v155 = vsel %vm153, %v136, %v145
    %v156 = vsel %vm153, %v137, %v146
    %v157 = vsel %vm153, %v138, %v147
    %v158 = vsel %vm153, %v139, %v148
    %v159 = vsel %vm153, %v140, %v149
    %v160 = vsel %vm153, %v141, %v150
    %v161 = vsel %vm153, %v142, %v151
    %v162 = vsel %vm153, %v143, %v152
    %v163 = vsel %vm153, %v144, %v135
    %v164 = vsel %vm153, %v145, %v136
    %v165 = vsel %vm153, %v146, %v137
    %v166 = vsel %vm153, %v147, %v138
    %v167 = vsel %vm153, %v148, %v139
    %v168 = vsel %vm153, %v149, %v140
    %v169 = vsel %vm153, %v150, %v141
    %v170 = vsel %vm153, %v151, %v142
    %v171 = vsel %vm153, %v152, %v143
    %v172 = vsel %vm133, 0.0, %v154
    %v173 = vsel %vm134, 0.0, %v163
    %v174 = vsel %vm133, 0.0, %v155
    %v175 = vsel %vm134, 0.0, %v164
    %v176 = vsel %vm133, 0.0, %v156
    %v177 = vsel %vm134, 0.0, %v165
    %v178 = vsel %vm133, 0.0, %v157
    %v179 = vsel %vm134, 0.0, %v166
    %v180 = vsel %vm133, 0.0, %v158
    %v181 = vsel %vm134, 0.0, %v167
    %v182 = vsel %vm133, 0.0, %v159
    %v183 = vsel %vm134, 0.0, %v168
    %v184 = vsel %vm133, 0.0, %v160
    %v185 = vsel %vm134, 0.0, %v169
    %v186 = vsel %vm133, 0.0, %v161
    %v187 = vsel %vm134, 0.0, %v170
    %v188 = vsel %vm133, 0.0, %v162
    %v189 = vsel %vm134, 0.0, %v171
    %v190 = vlaneseq
    %v191 = vshrl.u32 %v190, 7
    %v192 = vsub.s32 0, %v191
    %v193 = vrot.slane %v43, %v192
    %v194 = vmul.f32 %v193, %v115
    %v195 = vmul.f32 %v193, %v116
    %v196 = vmul.f32 %v193, %v117
    %v197 = vmul.f32 %v193, %v118
    %v198 = vmul.f32 %v193, %v119
    %v199 = vmul.f32 %v193, %v120
    %v200 = vmul.f32 %v193, %v121
    %v201 = vmul.f32 %v193, %v122
    %v202 = vmul.f32 %v193, %v123
    %v203 = vmul.f32 %v193, %v124
    %v204 = vmul.f32 %v193, %v125
    %v205 = vmul.f32 %v193, %v126
    %v206 = vmul.f32 %v193, %v127
    %v207 = vmul.f32 %v193, %v128
    %v208 = vlaneseq
    %v209 = vshrl.u32 %v208, 7
    %v210 = vsub.s32 0, %v209
    %v211 = vrot.slane %v44, %v210
    %v212 = vmul.f32 %v211, %v55
    %v213 = vmul.f32 %v211, %v56
    %v214 = vmul.f32 %v211, %v57
    %v215 = vmul.f32 %v211, %v58
    %v216 = vmul.f32 %v211, %v59
    %v217 = vmul.f32 %v211, %v60
    %v218 = vmul.f32 %v211, %v61
    %v219 = vmul.f32 %v211, %v62
    %v220 = vmul.f32 %v211, %v63
    %v221 = vmul.f32 %v211, %v64
    %v222 = vmul.f32 %v211, %v65
    %v223 = vmul.f32 %v211, %v66
    %v224 = vmul.f32 %v211, %v67
    %v225 = vmul.f32 %v211, %v68
    %v226 = vadd.f32 %v194, %v212
    %v227 = vadd.f32 %v195, %v213
    %v228 = vadd.f32 %v196, %v214
    %v229 = vadd.f32 %v197, %v215
    %v230 = vadd.f32 %v198, %v216
    %v231 = vadd.f32 %v199, %v217
    %v232 = vadd.f32 %v200, %v218
    %v233 = vadd.f32 %v201, %v219
    %v234 = vadd.f32 %v202, %v220
    %v235 = vadd.f32 %v203, %v221
    %v236 = vadd.f32 %v204, %v222
    %v237 = vadd.f32 %v205, %v223
    %v238 = vadd.f32 %v206, %v224
    %v239 = vadd.f32 %v207, %v225
    %v240 = vlaneseq
    %v241 = vshrl.u32 %v240, 7
    %v242 = vsub.s32 0, %v241
    %v243 = vrot.slane %v45, %v242
    %v244 = vmul.f32 %v243, %v172
    %v245 = vmul.f32 %v243, %v173
    %v246 = vmul.f32 %v243, %v174
    %v247 = vmul.f32 %v243, %v175
    %v248 = vmul.f32 %v243, %v176
    %v249 = vmul.f32 %v243, %v177
    %v250 = vmul.f32 %v243, %v178
    %v251 = vmul.f32 %v243, %v179
    %v252 = vmul.f32 %v243, %v180
    %v253 = vmul.f32 %v243, %v181
    %v254 = vmul.f32 %v243, %v182
    %v255 = vmul.f32 %v243, %v183
    %v256 = vmul.f32 %v243, %v184
    %v257 = vmul.f32 %v243, %v185
    %v258 = vadd.f32 %v226, %v244
    %v259 = vadd.f32 %v227, %v245
    %v260 = vadd.f32 %v228, %v246
    %v261 = vadd.f32 %v229, %v247
    %v262 = vadd.f32 %v230, %v248
    %v263 = vadd.f32 %v231, %v249
    %v264 = vadd.f32 %v232, %v250
    %v265 = vadd.f32 %v233, %v251
    %v266 = vadd.f32 %v234, %v252
    %v267 = vadd.f32 %v235, %v253
    %v268 = vadd.f32 %v236, %v254
    %v269 = vadd.f32 %v237, %v255
    %v270 = vadd.f32 %v238, %v256
    %v271 = vadd.f32 %v239, %v257
    %v272 = vlaneseq
    %v273 = vshrl.u32 %v272, 7
    %v274 = vsub.s32 0, %v273
    %v275 = vrot.slane %v48, %v274
    %v276 = vmul.f32 %v275, %v55
    %v277 = vmul.f32 %v275, %v56
    %v278 = vmul.f32 %v275, %v57
    %v279 = vmul.f32 %v275, %v58
    %v280 = vmul.f32 %v275, %v59
    %v281 = vmul.f32 %v275, %v60
    %v282 = vmul.f32 %v275, %v61
    %v283 = vmul.f32 %v275, %v62
    %v284 = vmul.f32 %v275, %v63
    %v285 = vmul.f32 %v275, %v64
    %v286 = vmul.f32 %v275, %v65
    %v287 = vmul.f32 %v275, %v66
    %v288 = vmul.f32 %v275, %v67
    %v289 = vmul.f32 %v275, %v68
    %v290 = vmul.f32 %v275, %v69
    %v291 = vmul.f32 %v275, %v70
    %v293 = vlaneseq
    %v294 = vshrl.u32 %v293, 7
    %v295 = vsub.s32 0, %v294
    %v296 = vrot.slane %v54, %v295
    %v298 = vadd.f32 %v276, %v296
    %v299 = vadd.f32 %v277, %v296
    %v300 = vadd.f32 %v278, %v296
    %v301 = vadd.f32 %v279, %v296
    %v302 = vadd.f32 %v280, %v296
    %v303 = vadd.f32 %v281, %v296
    %v304 = vadd.f32 %v282, %v296
    %v305 = vadd.f32 %v283, %v296
    %v306 = vadd.f32 %v284, %v296
    %v307 = vadd.f32 %v285, %v296
    %v308 = vadd.f32 %v286, %v296
    %v309 = vadd.f32 %v287, %v296
    %v310 = vadd.f32 %v288, %v296
    %v311 = vadd.f32 %v289, %v296
    %v312 = vadd.f32 %v290, %v296
    %v313 = vadd.f32 %v291, %v296
    %v314 = vlaneseq
    %v315 = vshrl.u32 %v314, 7
    %v316 = vsub.s32 0, %v315
    %v317 = vrot.slane %v47, %v316
    %v318 = vmul.f32 %v317, %v115
    %v319 = vmul.f32 %v317, %v116
    %v320 = vmul.f32 %v317, %v117
    %v321 = vmul.f32 %v317, %v118
    %v322 = vmul.f32 %v317, %v119
    %v323 = vmul.f32 %v317, %v120
    %v324 = vmul.f32 %v317, %v121
    %v325 = vmul.f32 %v317, %v122
    %v326 = vmul.f32 %v317, %v123
    %v327 = vmul.f32 %v317, %v124
    %v328 = vmul.f32 %v317, %v125
    %v329 = vmul.f32 %v317, %v126
    %v330 = vmul.f32 %v317, %v127
    %v331 = vmul.f32 %v317, %v128
    %v332 = vmul.f32 %v317, %v129
    %v333 = vmul.f32 %v317, %v130
    %v334 = vadd.f32 %v298, %v318
    %v335 = vadd.f32 %v299, %v319
    %v336 = vadd.f32 %v300, %v320
    %v337 = vadd.f32 %v301, %v321
    %v338 = vadd.f32 %v302, %v322
    %v339 = vadd.f32 %v303, %v323
    %v340 = vadd.f32 %v304, %v324
    %v341 = vadd.f32 %v305, %v325
    %v342 = vadd.f32 %v306, %v326
    %v343 = vadd.f32 %v307, %v327
    %v344 = vadd.f32 %v308, %v328
    %v345 = vadd.f32 %v309, %v329
    %v346 = vadd.f32 %v310, %v330
    %v347 = vadd.f32 %v311, %v331
    %v348 = vadd.f32 %v312, %v332
    %v349 = vadd.f32 %v313, %v333
    %v350 = vlaneseq
    %v351 = vshrl.u32 %v350, 7
    %v352 = vsub.s32 0, %v351
    %v353 = vrot.slane %v49, %v352
    %v354 = vmul.f32 %v353, %v172
    %v355 = vmul.f32 %v353, %v173
    %v356 = vmul.f32 %v353, %v174
    %v357 = vmul.f32 %v353, %v175
    %v358 = vmul.f32 %v353, %v176
    %v359 = vmul.f32 %v353, %v177
    %v360 = vmul.f32 %v353, %v178
    %v361 = vmul.f32 %v353, %v179
    %v362 = vmul.f32 %v353, %v180
    %v363 = vmul.f32 %v353, %v181
    %v364 = vmul.f32 %v353, %v182
    %v365 = vmul.f32 %v353, %v183
    %v366 = vmul.f32 %v353, %v184
    %v367 = vmul.f32 %v353, %v185
    %v368 = vmul.f32 %v353, %v186
    %v369 = vmul.f32 %v353, %v187
    %v370 = vadd.f32 %v334, %v354
    %v371 = vadd.f32 %v335, %v355
    %v372 = vadd.f32 %v336, %v356
    %v373 = vadd.f32 %v337, %v357
    %v374 = vadd.f32 %v338, %v358
    %v375 = vadd.f32 %v339, %v359
    %v376 = vadd.f32 %v340, %v360
    %v377 = vadd.f32 %v341, %v361
    %v378 = vadd.f32 %v342, %v362
    %v379 = vadd.f32 %v343, %v363
    %v380 = vadd.f32 %v344, %v364
    %v381 = vadd.f32 %v345, %v365
    %v382 = vadd.f32 %v346, %v366
    %v383 = vadd.f32 %v347, %v367
    %v384 = vadd.f32 %v348, %v368
    %v385 = vadd.f32 %v349, %v369
    %v386 = vlaneseq
    %v387 = vshrl.u32 %v386, 7
    %v388 = vsub.s32 0, %v387
    %v389 = vrot.slane %v51, %v388
    %v390 = vmul.f32 %v389, %v117
    %v391 = vmul.f32 %v389, %v118
    %v392 = vmul.f32 %v389, %v119
    %v393 = vmul.f32 %v389, %v120
    %v394 = vmul.f32 %v389, %v121
    %v395 = vmul.f32 %v389, %v122
    %v396 = vmul.f32 %v389, %v123
    %v397 = vmul.f32 %v389, %v124
    %v398 = vmul.f32 %v389, %v125
    %v399 = vmul.f32 %v389, %v126
    %v400 = vmul.f32 %v389, %v127
    %v401 = vmul.f32 %v389, %v128
    %v402 = vmul.f32 %v389, %v129
    %v403 = vmul.f32 %v389, %v130
    %v404 = vmul.f32 %v389, %v131
    %v405 = vmul.f32 %v389, %v132
    %v406 = vlaneseq
    %v407 = vshrl.u32 %v406, 7
    %v408 = vsub.s32 0, %v407
    %v409 = vrot.slane %v52, %v408
    %v410 = vmul.f32 %v409, %v57
    %v411 = vmul.f32 %v409, %v58
    %v412 = vmul.f32 %v409, %v59
    %v413 = vmul.f32 %v409, %v60
    %v414 = vmul.f32 %v409, %v61
    %v415 = vmul.f32 %v409, %v62
    %v416 = vmul.f32 %v409, %v63
    %v417 = vmul.f32 %v409, %v64
    %v418 = vmul.f32 %v409, %v65
    %v419 = vmul.f32 %v409, %v66
    %v420 = vmul.f32 %v409, %v67
    %v421 = vmul.f32 %v409, %v68
    %v422 = vmul.f32 %v409, %v69
    %v423 = vmul.f32 %v409, %v70
    %v424 = vmul.f32 %v409, %v71
    %v425 = vmul.f32 %v409, %v72
    %v426 = vadd.f32 %v390, %v410
    %v427 = vadd.f32 %v391, %v411
    %v428 = vadd.f32 %v392, %v412
    %v429 = vadd.f32 %v393, %v413
    %v430 = vadd.f32 %v394, %v414
    %v431 = vadd.f32 %v395, %v415
    %v432 = vadd.f32 %v396, %v416
    %v433 = vadd.f32 %v397, %v417
    %v434 = vadd.f32 %v398, %v418
    %v435 = vadd.f32 %v399, %v419
    %v436 = vadd.f32 %v400, %v420
    %v437 = vadd.f32 %v401, %v421
    %v438 = vadd.f32 %v402, %v422
    %v439 = vadd.f32 %v403, %v423
    %v440 = vadd.f32 %v404, %v424
    %v441 = vadd.f32 %v405, %v425
    %v442 = vlaneseq
    %v443 = vshrl.u32 %v442, 7
    %v444 = vsub.s32 0, %v443
    %v445 = vrot.slane %v53, %v444
    %v446 = vmul.f32 %v445, %v174
    %v447 = vmul.f32 %v445, %v175
    %v448 = vmul.f32 %v445, %v176
    %v449 = vmul.f32 %v445, %v177
    %v450 = vmul.f32 %v445, %v178
    %v451 = vmul.f32 %v445, %v179
    %v452 = vmul.f32 %v445, %v180
    %v453 = vmul.f32 %v445, %v181
    %v454 = vmul.f32 %v445, %v182
    %v455 = vmul.f32 %v445, %v183
    %v456 = vmul.f32 %v445, %v184
    %v457 = vmul.f32 %v445, %v185
    %v458 = vmul.f32 %v445, %v186
    %v459 = vmul.f32 %v445, %v187
    %v460 = vmul.f32 %v445, %v188
    %v461 = vmul.f32 %v445, %v189
    %v462 = vadd.f32 %v426, %v446
    %v463 = vadd.f32 %v427, %v447
    %v464 = vadd.f32 %v428, %v448
    %v465 = vadd.f32 %v429, %v449
    %v466 = vadd.f32 %v430, %v450
    %v467 = vadd.f32 %v431, %v451
    %v468 = vadd.f32 %v432, %v452
    %v469 = vadd.f32 %v433, %v453
    %v470 = vadd.f32 %v434, %v454
    %v471 = vadd.f32 %v435, %v455
    %v472 = vadd.f32 %v436, %v456
    %v473 = vadd.f32 %v437, %v457
    %v474 = vadd.f32 %v438, %v458
    %v475 = vadd.f32 %v439, %v459
    %v476 = vadd.f32 %v440, %v460
    %v477 = vadd.f32 %v441, %v461
    %v478 = vadd.f32 %v370, 0.0
    %v479 = vadd.f32 %v371, 0.0
    %v480 = vadd.f32 %v372, %v258
    %v481 = vadd.f32 %v373, %v259
    %v482 = vadd.f32 %v374, %v260
    %v483 = vadd.f32 %v375, %v261
    %v484 = vadd.f32 %v376, %v262
    %v485 = vadd.f32 %v377, %v263
    %v486 = vadd.f32 %v378, %v264
    %v487 = vadd.f32 %v379, %v265
    %v488 = vadd.f32 %v380, %v266
    %v489 = vadd.f32 %v381, %v267
    %v490 = vadd.f32 %v382, %v268
    %v491 = vadd.f32 %v383, %v269
    %v492 = vadd.f32 %v384, %v270
    %v493 = vadd.f32 %v385, %v271
    %v494 = vadd.f32 %v478, %v462
    %v495 = vadd.f32 %v479, %v463
    %v496 = vadd.f32 %v480, %v464
    %v497 = vadd.f32 %v481, %v465
    %v498 = vadd.f32 %v482, %v466
    %v499 = vadd.f32 %v483, %v467
    %v500 = vadd.f32 %v484, %v468
    %v501 = vadd.f32 %v485, %v469
    %v502 = vadd.f32 %v486, %v470
    %v503 = vadd.f32 %v487, %v471
    %v504 = vadd.f32 %v488, %v472
    %v505 = vadd.f32 %v489, %v473
    %v506 = vadd.f32 %v490, %v474
    %v507 = vadd.f32 %v491, %v475
    %v508 = vadd.f32 %v492, %v476
    %v509 = vadd.f32 %v493, %v477
    %510 = vst [vmem:[#allocation7] sm:$0xff] %v494
    %511 = vst [vmem:[#allocation7 + $0x8] sm:$0xff] %v495
    %512 = vst [vmem:[#allocation7 + $0x10] sm:$0xff] %v496
    %513 = vst [vmem:[#allocation7 + $0x18] sm:$0xff] %v497
    %514 = vst [vmem:[#allocation7 + $0x20] sm:$0xff] %v498
    %515 = vst [vmem:[#allocation7 + $0x28] sm:$0xff] %v499
    %516 = vst [vmem:[#allocation7 + $0x30] sm:$0xff] %v500
    %517 = vst [vmem:[#allocation7 + $0x38] sm:$0xff] %v501
    %518 = vst [vmem:[#allocation7 + $0x40] sm:$0xff] %v502
    %519 = vst [vmem:[#allocation7 + $0x48] sm:$0xff] %v503
    %520 = vst [vmem:[#allocation7 + $0x50] sm:$0xff] %v504
    %521 = vst [vmem:[#allocation7 + $0x58] sm:$0xff] %v505
    %522 = vst [vmem:[#allocation7 + $0x60] sm:$0xff] %v506
    %523 = vst [vmem:[#allocation7 + $0x68] sm:$0xff] %v507
    %524 = vst [vmem:[#allocation7 + $0x70] sm:$0xff] %v508
    %525 = vst [vmem:[#allocation7 + $0x78] sm:$0xff] %v509
    %s526 = scalar_lea.vmem [#allocation5], 112
    %v527 = vld [vmem:[%s526] sm:$0xff]
    %v528 = vld [vmem:[%s526 + $0x8] sm:$0xff]
    %v529 = vld [vmem:[%s526 + $0x10] sm:$0xff]
    %v530 = vld [vmem:[%s526 + $0x18] sm:$0xff]
    %v531 = vld [vmem:[%s526 + $0x20] sm:$0xff]
    %v532 = vld [vmem:[%s526 + $0x28] sm:$0xff]
    %v533 = vld [vmem:[%s526 + $0x30] sm:$0xff]
    %v534 = vld [vmem:[%s526 + $0x38] sm:$0xff]
    %v535 = vld [vmem:[%s526 + $0x40] sm:$0xff]
    %v536 = vld [vmem:[%s526 + $0x48] sm:$0xff]
    %v537 = vld [vmem:[%s526 + $0x50] sm:$0xff]
    %v538 = vld [vmem:[%s526 + $0x58] sm:$0xff]
    %v539 = vld [vmem:[%s526 + $0x60] sm:$0xff]
    %v540 = vld [vmem:[%s526 + $0x68] sm:$0xff]
    %v541 = vld [vmem:[%s526 + $0x70] sm:$0xff]
    %v542 = vld [vmem:[%s526 + $0x78] sm:$0xff]
    %v543 = vld [vmem:[%s526 + $0x80] sm:$0xff]
    %v544 = vld [vmem:[%s526 + $0x88] sm:$0xff]
    %v545 = vrot.slane %v527, 7
    %v546 = vrot.slane %v529, 7
    %v547 = vrot.slane %v531, 7
    %v548 = vrot.slane %v533, 7
    %v549 = vrot.slane %v535, 7
    %v550 = vrot.slane %v537, 7
    %v551 = vrot.slane %v539, 7
    %v552 = vrot.slane %v541, 7
    %v553 = vrot.slane %v543, 7
    %v554 = vrot.slane %v528, 7
    %v555 = vrot.slane %v530, 7
    %v556 = vrot.slane %v532, 7
    %v557 = vrot.slane %v534, 7
    %v558 = vrot.slane %v536, 7
    %v559 = vrot.slane %v538, 7
    %v560 = vrot.slane %v540, 7
    %v561 = vrot.slane %v542, 7
    %v562 = vrot.slane %v544, 7
    %v563 = vsel %vm96, %v545, %v554
    %v564 = vsel %vm96, %v546, %v555
    %v565 = vsel %vm96, %v547, %v556
    %v566 = vsel %vm96, %v548, %v557
    %v567 = vsel %vm96, %v549, %v558
    %v568 = vsel %vm96, %v550, %v559
    %v569 = vsel %vm96, %v551, %v560
    %v570 = vsel %vm96, %v552, %v561
    %v571 = vsel %vm96, %v553, %v562
    %v572 = vsel %vm96, %v554, %v545
    %v573 = vsel %vm96, %v555, %v546
    %v574 = vsel %vm96, %v556, %v547
    %v575 = vsel %vm96, %v557, %v548
    %v576 = vsel %vm96, %v558, %v549
    %v577 = vsel %vm96, %v559, %v550
    %v578 = vsel %vm96, %v560, %v551
    %v579 = vsel %vm96, %v561, %v552
    %v580 = vsel %vm96, %v562, %v553
    %v581 = vsel %vm76, 0.0, %v572
    %v582 = vsel %vm77, 0.0, %v563
    %v583 = vsel %vm76, 0.0, %v573
    %v584 = vsel %vm77, 0.0, %v564
    %v585 = vsel %vm76, 0.0, %v574
    %v586 = vsel %vm77, 0.0, %v565
    %v587 = vsel %vm76, 0.0, %v575
    %v588 = vsel %vm77, 0.0, %v566
    %v589 = vsel %vm76, 0.0, %v576
    %v590 = vsel %vm77, 0.0, %v567
    %v591 = vsel %vm76, 0.0, %v577
    %v592 = vsel %vm77, 0.0, %v568
    %v593 = vsel %vm76, 0.0, %v578
    %v594 = vsel %vm77, 0.0, %v569
    %v595 = vsel %vm76, 0.0, %v579
    %v596 = vsel %vm77, 0.0, %v570
    %v597 = vsel %vm76, 0.0, %v580
    %v598 = vsel %vm77, 0.0, %v571
    %v599 = vrot.slane %v527, 1
    %v600 = vrot.slane %v529, 1
    %v601 = vrot.slane %v531, 1
    %v602 = vrot.slane %v533, 1
    %v603 = vrot.slane %v535, 1
    %v604 = vrot.slane %v537, 1
    %v605 = vrot.slane %v539, 1
    %v606 = vrot.slane %v541, 1
    %v607 = vrot.slane %v543, 1
    %v608 = vrot.slane %v528, 1
    %v609 = vrot.slane %v530, 1
    %v610 = vrot.slane %v532, 1
    %v611 = vrot.slane %v534, 1
    %v612 = vrot.slane %v536, 1
    %v613 = vrot.slane %v538, 1
    %v614 = vrot.slane %v540, 1
    %v615 = vrot.slane %v542, 1
    %v616 = vrot.slane %v544, 1
    %v617 = vsel %vm153, %v599, %v608
    %v618 = vsel %vm153, %v600, %v609
    %v619 = vsel %vm153, %v601, %v610
    %v620 = vsel %vm153, %v602, %v611
    %v621 = vsel %vm153, %v603, %v612
    %v622 = vsel %vm153, %v604, %v613
    %v623 = vsel %vm153, %v605, %v614
    %v624 = vsel %vm153, %v606, %v615
    %v625 = vsel %vm153, %v607, %v616
    %v626 = vsel %vm153, %v608, %v599
    %v627 = vsel %vm153, %v609, %v600
    %v628 = vsel %vm153, %v610, %v601
    %v629 = vsel %vm153, %v611, %v602
    %v630 = vsel %vm153, %v612, %v603
    %v631 = vsel %vm153, %v613, %v604
    %v632 = vsel %vm153, %v614, %v605
    %v633 = vsel %vm153, %v615, %v606
    %v634 = vsel %vm153, %v616, %v607
    %v635 = vsel %vm133, 0.0, %v617
    %v636 = vsel %vm134, 0.0, %v626
    %v637 = vsel %vm133, 0.0, %v618
    %v638 = vsel %vm134, 0.0, %v627
    %v639 = vsel %vm133, 0.0, %v619
    %v640 = vsel %vm134, 0.0, %v628
    %v641 = vsel %vm133, 0.0, %v620
    %v642 = vsel %vm134, 0.0, %v629
    %v643 = vsel %vm133, 0.0, %v621
    %v644 = vsel %vm134, 0.0, %v630
    %v645 = vsel %vm133, 0.0, %v622
    %v646 = vsel %vm134, 0.0, %v631
    %v647 = vsel %vm133, 0.0, %v623
    %v648 = vsel %vm134, 0.0, %v632
    %v649 = vsel %vm133, 0.0, %v624
    %v650 = vsel %vm134, 0.0, %v633
    %v651 = vsel %vm133, 0.0, %v625
    %v652 = vsel %vm134, 0.0, %v634
    %v653 = vmul.f32 %v193, %v581
    %v654 = vmul.f32 %v193, %v582
    %v655 = vmul.f32 %v193, %v583
    %v656 = vmul.f32 %v193, %v584
    %v657 = vmul.f32 %v193, %v585
    %v658 = vmul.f32 %v193, %v586
    %v659 = vmul.f32 %v193, %v587
    %v660 = vmul.f32 %v193, %v588
    %v661 = vmul.f32 %v193, %v589
    %v662 = vmul.f32 %v193, %v590
    %v663 = vmul.f32 %v193, %v591
    %v664 = vmul.f32 %v193, %v592
    %v665 = vmul.f32 %v193, %v593
    %v666 = vmul.f32 %v193, %v594
    %v667 = vmul.f32 %v193, %v595
    %v668 = vmul.f32 %v193, %v596
    %v669 = vmul.f32 %v211, %v527
    %v670 = vmul.f32 %v211, %v528
    %v671 = vmul.f32 %v211, %v529
    %v672 = vmul.f32 %v211, %v530
    %v673 = vmul.f32 %v211, %v531
    %v674 = vmul.f32 %v211, %v532
    %v675 = vmul.f32 %v211, %v533
    %v676 = vmul.f32 %v211, %v534
    %v677 = vmul.f32 %v211, %v535
    %v678 = vmul.f32 %v211, %v536
    %v679 = vmul.f32 %v211, %v537
    %v680 = vmul.f32 %v211, %v538
    %v681 = vmul.f32 %v211, %v539
    %v682 = vmul.f32 %v211, %v540
    %v683 = vmul.f32 %v211, %v541
    %v684 = vmul.f32 %v211, %v542
    %v685 = vadd.f32 %v653, %v669
    %v686 = vadd.f32 %v654, %v670
    %v687 = vadd.f32 %v655, %v671
    %v688 = vadd.f32 %v656, %v672
    %v689 = vadd.f32 %v657, %v673
    %v690 = vadd.f32 %v658, %v674
    %v691 = vadd.f32 %v659, %v675
    %v692 = vadd.f32 %v660, %v676
    %v693 = vadd.f32 %v661, %v677
    %v694 = vadd.f32 %v662, %v678
    %v695 = vadd.f32 %v663, %v679
    %v696 = vadd.f32 %v664, %v680
    %v697 = vadd.f32 %v665, %v681
    %v698 = vadd.f32 %v666, %v682
    %v699 = vadd.f32 %v667, %v683
    %v700 = vadd.f32 %v668, %v684
    %v701 = vmul.f32 %v243, %v635
    %v702 = vmul.f32 %v243, %v636
    %v703 = vmul.f32 %v243, %v637
    %v704 = vmul.f32 %v243, %v638
    %v705 = vmul.f32 %v243, %v639
    %v706 = vmul.f32 %v243, %v640
    %v707 = vmul.f32 %v243, %v641
    %v708 = vmul.f32 %v243, %v642
    %v709 = vmul.f32 %v243, %v643
    %v710 = vmul.f32 %v243, %v644
    %v711 = vmul.f32 %v243, %v645
    %v712 = vmul.f32 %v243, %v646
    %v713 = vmul.f32 %v243, %v647
    %v714 = vmul.f32 %v243, %v648
    %v715 = vmul.f32 %v243, %v649
    %v716 = vmul.f32 %v243, %v650
    %v717 = vadd.f32 %v685, %v701
    %v718 = vadd.f32 %v686, %v702
    %v719 = vadd.f32 %v687, %v703
    %v720 = vadd.f32 %v688, %v704
    %v721 = vadd.f32 %v689, %v705
    %v722 = vadd.f32 %v690, %v706
    %v723 = vadd.f32 %v691, %v707
    %v724 = vadd.f32 %v692, %v708
    %v725 = vadd.f32 %v693, %v709
    %v726 = vadd.f32 %v694, %v710
    %v727 = vadd.f32 %v695, %v711
    %v728 = vadd.f32 %v696, %v712
    %v729 = vadd.f32 %v697, %v713
    %v730 = vadd.f32 %v698, %v714
    %v731 = vadd.f32 %v699, %v715
    %v732 = vadd.f32 %v700, %v716
    %v733 = vmul.f32 %v275, %v529
    %v734 = vmul.f32 %v275, %v530
    %v735 = vmul.f32 %v275, %v531
    %v736 = vmul.f32 %v275, %v532
    %v737 = vmul.f32 %v275, %v533
    %v738 = vmul.f32 %v275, %v534
    %v739 = vmul.f32 %v275, %v535
    %v740 = vmul.f32 %v275, %v536
    %v741 = vmul.f32 %v275, %v537
    %v742 = vmul.f32 %v275, %v538
    %v743 = vmul.f32 %v275, %v539
    %v744 = vmul.f32 %v275, %v540
    %v745 = vmul.f32 %v275, %v541
    %v746 = vmul.f32 %v275, %v542
    %v747 = vmul.f32 %v275, %v543
    %v748 = vmul.f32 %v275, %v544
    %v749 = vadd.f32 %v733, %v296
    %v750 = vadd.f32 %v734, %v296
    %v751 = vadd.f32 %v735, %v296
    %v752 = vadd.f32 %v736, %v296
    %v753 = vadd.f32 %v737, %v296
    %v754 = vadd.f32 %v738, %v296
    %v755 = vadd.f32 %v739, %v296
    %v756 = vadd.f32 %v740, %v296
    %v757 = vadd.f32 %v741, %v296
    %v758 = vadd.f32 %v742, %v296
    %v759 = vadd.f32 %v743, %v296
    %v760 = vadd.f32 %v744, %v296
    %v761 = vadd.f32 %v745, %v296
    %v762 = vadd.f32 %v746, %v296
    %v763 = vadd.f32 %v747, %v296
    %v764 = vadd.f32 %v748, %v296
    %v765 = vmul.f32 %v317, %v583
    %v766 = vmul.f32 %v317, %v584
    %v767 = vmul.f32 %v317, %v585
    %v768 = vmul.f32 %v317, %v586
    %v769 = vmul.f32 %v317, %v587
    %v770 = vmul.f32 %v317, %v588
    %v771 = vmul.f32 %v317, %v589
    %v772 = vmul.f32 %v317, %v590
    %v773 = vmul.f32 %v317, %v591
    %v774 = vmul.f32 %v317, %v592
    %v775 = vmul.f32 %v317, %v593
    %v776 = vmul.f32 %v317, %v594
    %v777 = vmul.f32 %v317, %v595
    %v778 = vmul.f32 %v317, %v596
    %v779 = vmul.f32 %v317, %v597
    %v780 = vmul.f32 %v317, %v598
    %v781 = vadd.f32 %v749, %v765
    %v782 = vadd.f32 %v750, %v766
    %v783 = vadd.f32 %v751, %v767
    %v784 = vadd.f32 %v752, %v768
    %v785 = vadd.f32 %v753, %v769
    %v786 = vadd.f32 %v754, %v770
    %v787 = vadd.f32 %v755, %v771
    %v788 = vadd.f32 %v756, %v772
    %v789 = vadd.f32 %v757, %v773
    %v790 = vadd.f32 %v758, %v774
    %v791 = vadd.f32 %v759, %v775
    %v792 = vadd.f32 %v760, %v776
    %v793 = vadd.f32 %v761, %v777
    %v794 = vadd.f32 %v762, %v778
    %v795 = vadd.f32 %v763, %v779
    %v796 = vadd.f32 %v764, %v780
    %v797 = vmul.f32 %v353, %v637
    %v798 = vmul.f32 %v353, %v638
    %v799 = vmul.f32 %v353, %v639
    %v800 = vmul.f32 %v353, %v640
    %v801 = vmul.f32 %v353, %v641
    %v802 = vmul.f32 %v353, %v642
    %v803 = vmul.f32 %v353, %v643
    %v804 = vmul.f32 %v353, %v644
    %v805 = vmul.f32 %v353, %v645
    %v806 = vmul.f32 %v353, %v646
    %v807 = vmul.f32 %v353, %v647
    %v808 = vmul.f32 %v353, %v648
    %v809 = vmul.f32 %v353, %v649
    %v810 = vmul.f32 %v353, %v650
    %v811 = vmul.f32 %v353, %v651
    %v812 = vmul.f32 %v353, %v652
    %v813 = vadd.f32 %v781, %v797
    %v814 = vadd.f32 %v782, %v798
    %v815 = vadd.f32 %v783, %v799
    %v816 = vadd.f32 %v784, %v800
    %v817 = vadd.f32 %v785, %v801
    %v818 = vadd.f32 %v786, %v802
    %v819 = vadd.f32 %v787, %v803
    %v820 = vadd.f32 %v788, %v804
    %v821 = vadd.f32 %v789, %v805
    %v822 = vadd.f32 %v790, %v806
    %v823 = vadd.f32 %v791, %v807
    %v824 = vadd.f32 %v792, %v808
    %v825 = vadd.f32 %v793, %v809
    %v826 = vadd.f32 %v794, %v810
    %v827 = vadd.f32 %v795, %v811
    %v828 = vadd.f32 %v796, %v812
    %v829 = vmul.f32 %v389, %v585
    %v830 = vmul.f32 %v389, %v586
    %v831 = vmul.f32 %v389, %v587
    %v832 = vmul.f32 %v389, %v588
    %v833 = vmul.f32 %v389, %v589
    %v834 = vmul.f32 %v389, %v590
    %v835 = vmul.f32 %v389, %v591
    %v836 = vmul.f32 %v389, %v592
    %v837 = vmul.f32 %v389, %v593
    %v838 = vmul.f32 %v389, %v594
    %v839 = vmul.f32 %v389, %v595
    %v840 = vmul.f32 %v389, %v596
    %v841 = vmul.f32 %v389, %v597
    %v842 = vmul.f32 %v389, %v598
    %v843 = vmul.f32 %v409, %v531
    %v844 = vmul.f32 %v409, %v532
    %v845 = vmul.f32 %v409, %v533
    %v846 = vmul.f32 %v409, %v534
    %v847 = vmul.f32 %v409, %v535
    %v848 = vmul.f32 %v409, %v536
    %v849 = vmul.f32 %v409, %v537
    %v850 = vmul.f32 %v409, %v538
    %v851 = vmul.f32 %v409, %v539
    %v852 = vmul.f32 %v409, %v540
    %v853 = vmul.f32 %v409, %v541
    %v854 = vmul.f32 %v409, %v542
    %v855 = vmul.f32 %v409, %v543
    %v856 = vmul.f32 %v409, %v544
    %v857 = vadd.f32 %v829, %v843
    %v858 = vadd.f32 %v830, %v844
    %v859 = vadd.f32 %v831, %v845
    %v860 = vadd.f32 %v832, %v846
    %v861 = vadd.f32 %v833, %v847
    %v862 = vadd.f32 %v834, %v848
    %v863 = vadd.f32 %v835, %v849
    %v864 = vadd.f32 %v836, %v850
    %v865 = vadd.f32 %v837, %v851
    %v866 = vadd.f32 %v838, %v852
    %v867 = vadd.f32 %v839, %v853
    %v868 = vadd.f32 %v840, %v854
    %v869 = vadd.f32 %v841, %v855
    %v870 = vadd.f32 %v842, %v856
    %v871 = vmul.f32 %v445, %v639
    %v872 = vmul.f32 %v445, %v640
    %v873 = vmul.f32 %v445, %v641
    %v874 = vmul.f32 %v445, %v642
    %v875 = vmul.f32 %v445, %v643
    %v876 = vmul.f32 %v445, %v644
    %v877 = vmul.f32 %v445, %v645
    %v878 = vmul.f32 %v445, %v646
    %v879 = vmul.f32 %v445, %v647
    %v880 = vmul.f32 %v445, %v648
    %v881 = vmul.f32 %v445, %v649
    %v882 = vmul.f32 %v445, %v650
    %v883 = vmul.f32 %v445, %v651
    %v884 = vmul.f32 %v445, %v652
    %v885 = vadd.f32 %v857, %v871
    %v886 = vadd.f32 %v858, %v872
    %v887 = vadd.f32 %v859, %v873
    %v888 = vadd.f32 %v860, %v874
    %v889 = vadd.f32 %v861, %v875
    %v890 = vadd.f32 %v862, %v876
    %v891 = vadd.f32 %v863, %v877
    %v892 = vadd.f32 %v864, %v878
    %v893 = vadd.f32 %v865, %v879
    %v894 = vadd.f32 %v866, %v880
    %v895 = vadd.f32 %v867, %v881
    %v896 = vadd.f32 %v868, %v882
    %v897 = vadd.f32 %v869, %v883
    %v898 = vadd.f32 %v870, %v884
    %v899 = vadd.f32 %v813, %v717
    %v900 = vadd.f32 %v814, %v718
    %v901 = vadd.f32 %v815, %v719
    %v902 = vadd.f32 %v816, %v720
    %v903 = vadd.f32 %v817, %v721
    %v904 = vadd.f32 %v818, %v722
    %v905 = vadd.f32 %v819, %v723
    %v906 = vadd.f32 %v820, %v724
    %v907 = vadd.f32 %v821, %v725
    %v908 = vadd.f32 %v822, %v726
    %v909 = vadd.f32 %v823, %v727
    %v910 = vadd.f32 %v824, %v728
    %v911 = vadd.f32 %v825, %v729
    %v912 = vadd.f32 %v826, %v730
    %v913 = vadd.f32 %v827, %v731
    %v914 = vadd.f32 %v828, %v732
    %v915 = vadd.f32 %v899, %v885
    %v916 = vadd.f32 %v900, %v886
    %v917 = vadd.f32 %v901, %v887
    %v918 = vadd.f32 %v902, %v888
    %v919 = vadd.f32 %v903, %v889
    %v920 = vadd.f32 %v904, %v890
    %v921 = vadd.f32 %v905, %v891
    %v922 = vadd.f32 %v906, %v892
    %v923 = vadd.f32 %v907, %v893
    %v924 = vadd.f32 %v908, %v894
    %v925 = vadd.f32 %v909, %v895
    %v926 = vadd.f32 %v910, %v896
    %v927 = vadd.f32 %v911, %v897
    %v928 = vadd.f32 %v912, %v898
    %v929 = vadd.f32 %v913, 0.0
    %v930 = vadd.f32 %v914, 0.0
    %s931 = scalar_lea.vmem [#allocation7], 128
    %932 = vst [vmem:[%s931] sm:$0xff] %v915
    %933 = vst [vmem:[%s931 + $0x8] sm:$0xff] %v916
    %934 = vst [vmem:[%s931 + $0x10] sm:$0xff] %v917
    %935 = vst [vmem:[%s931 + $0x18] sm:$0xff] %v918
    %936 = vst [vmem:[%s931 + $0x20] sm:$0xff] %v919
    %937 = vst [vmem:[%s931 + $0x28] sm:$0xff] %v920
    %938 = vst [vmem:[%s931 + $0x30] sm:$0xff] %v921
    %939 = vst [vmem:[%s931 + $0x38] sm:$0xff] %v922
    %940 = vst [vmem:[%s931 + $0x40] sm:$0xff] %v923
    %941 = vst [vmem:[%s931 + $0x48] sm:$0xff] %v924
    %942 = vst [vmem:[%s931 + $0x50] sm:$0xff] %v925
    %943 = vst [vmem:[%s931 + $0x58] sm:$0xff] %v926
    %944 = vst [vmem:[%s931 + $0x60] sm:$0xff] %v927
    %945 = vst [vmem:[%s931 + $0x68] sm:$0xff] %v928
    %946 = vst [vmem:[%s931 + $0x70] sm:$0xff] %v929
    %947 = vst [vmem:[%s931 + $0x78] sm:$0xff] %v930
    // Predicated region
    $region22: #{tpu_custom_call.1} parent=1 // pred_check
      _
    $region23: #{tpu_custom_call.1} parent=1 // pred_check_branch
      %949 = sbr.rel (0) target = $region25
    $region24: #{tpu_custom_call.1} parent=1 // pred_region
      %s951 = ssub.s32 4096, 4096
      %952 = vsyncadd [#allocation4], %s951
      %s953 = sshll.u32 [#allocation7], 4
      %s954 = int_to_ptr.vmem [resolvable:$true] %s953
      %959 = dma.vmem_to_hbm [thread:$0]  %s954, 4096, %s3, [#allocation4], 128, 128, 8
    $region25: #{tpu_custom_call.1} parent=1 // pred_fallthru
      _
    // Predicated region
    $region26: #{tpu_custom_call.1} parent=1 // pred_check
      _
    $region27: #{tpu_custom_call.1} parent=1 // pred_check_branch
      %961 = sbr.rel (0) target = $region29
    $region28: #{tpu_custom_call.1} parent=1 // pred_region
      %962 = dma.done [#allocation4], 4096
    $region29: #{tpu_custom_call.1} parent=1 // pred_fallthru
      _
    %963 = vsyncpa [#allocation3], 1
    %964 = vsyncpa [#allocation6], 1
    %965 = vsyncpa [#allocation4], 1

</llo_original>
